<compile_context>
chip_gen: v5e
topology: v5e:2x2
jax: 0.10.0
libtpu: 0.0.40
codegen_flags: <defaults>
</compile_context>

<pallas_src>
import functools

import jax
import jax.numpy as jnp
from jax.experimental import pallas as pl
from jax.experimental.pallas import tpu as pltpu

LANE = 128    # TPU lane width
SUBLANE = 8   # TPU sublane width


def _round_up(n, m):
    return ((n + m - 1) // m) * m


def _cdiv(a, b):
    return (a + b - 1) // b


def qnet_kernel(x_ref, w1_ref, b1_ref, w2_ref, b2_ref, w3_ref, b3_ref, o_ref):
    # bf16 operands into the MXU, f32 accumulation; bias-add / ReLU in f32 on the VPU.
    x = x_ref[...].astype(jnp.bfloat16)
    h1 = jnp.dot(x, w1_ref[...], preferred_element_type=jnp.float32) + b1_ref[...]
    h1 = jnp.maximum(h1, 0.0)
    h2 = jnp.dot(h1.astype(jnp.bfloat16), w2_ref[...],
                 preferred_element_type=jnp.float32) + b2_ref[...]
    h2 = jnp.maximum(h2, 0.0)
    y = jnp.dot(h2.astype(jnp.bfloat16), w3_ref[...],
                preferred_element_type=jnp.float32) + b3_ref[...]        # (tb, Ap) f32
    # Pack the few real action columns lane-dense: store transposed so the batch
    # (a multiple of 128) runs along lanes and only round_up(A, 8) sublane rows are
    # written back -> output HBM traffic drops ~16-32x vs. the 128-lane f32 pad.
    aout = o_ref.shape[0]
    o_ref[...] = y.T[:aout, :]


def qnetwork_forward(x, params, *, block_b=2048):
    """x: [B, state_size] float32 (or bfloat16). params: w1,b1,w2,b2,w3,b3 float32.

    Weights are stored (in_features, out_features); returns [B, action_size] float32.
    """
    w1, b1, w2, b2, w3, b3 = (
        params["w1"], params["b1"], params["w2"], params["b2"],
        params["w3"], params["b3"],
    )
    B, S = x.shape
    L1, L2, A = w1.shape[1], w2.shape[1], w3.shape[1]
    L1p, L2p = _round_up(L1, LANE), _round_up(L2, LANE)
    Ap = _round_up(A, LANE)        # lane width of the 3rd matmul (keep minimal at 128;
                                   # kernel is HBM/overhead bound, not MXU bound)
    Aout = _round_up(A, SUBLANE)   # sublane rows of the transposed output hitting HBM

    # Zero-pad feature dims to lane width so matmuls / activations are lane-dense.
    # Padded rows/cols are zero -> valid outputs unchanged (ReLU(0) = 0).
    w1p = jnp.pad(w1, ((0, 0), (0, L1p - L1))).astype(jnp.bfloat16)
    b1p = jnp.pad(b1, ((0, 0), (0, L1p - L1)))
    w2p = jnp.pad(w2, ((0, L1p - L1), (0, L2p - L2))).astype(jnp.bfloat16)
    b2p = jnp.pad(b2, ((0, 0), (0, L2p - L2)))
    w3p = jnp.pad(w3, ((0, L2p - L2), (0, Ap - A))).astype(jnp.bfloat16)
    b3p = jnp.pad(b3, ((0, 0), (0, Ap - A)))

    # Batch tile: lane-aligned (batch is the lane dim of the transposed output),
    # large by default to amortize per-step overhead, and capped at ceil(B/2) once
    # B > 128 so the grid has >= 2 steps and both v7x TensorCores get work.
    tb = max(LANE, min(block_b, _round_up(B, LANE)))
    if B > LANE:
        tb = max(LANE, min(tb, _round_up(_cdiv(B, 2), LANE)))
    Bp = _round_up(B, tb)
    xp = jnp.pad(x, ((0, Bp - B), (0, 0)))
    grid = (Bp // tb,)

    const = lambda i: (0, 0)  # weights/biases: same block every grid step (VMEM-resident,
                              # never re-fetched; single-buffering them would only save
                              # ~140 KiB VMEM, not needed at this footprint)

    flops = 2 * Bp * (S * L1p + L1p * L2p + L2p * Ap)
    bytes_accessed = (
        xp.size * xp.dtype.itemsize          # input stream (dominant after the output fix)
        + Aout * Bp * 4                      # packed, transposed output stream
        + (w1p.size + w2p.size + w3p.size) * 2
        + (b1p.size + b2p.size + b3p.size) * 4
    )

    out_t = pl.pallas_call(
        qnet_kernel,
        out_shape=jax.ShapeDtypeStruct((Aout, Bp), jnp.float32),
        grid=grid,
        in_specs=[
            pl.BlockSpec((tb, S), lambda i: (i, 0)),
            pl.BlockSpec((S, L1p), const),
            pl.BlockSpec((1, L1p), const),
            pl.BlockSpec((L1p, L2p), const),
            pl.BlockSpec((1, L2p), const),
            pl.BlockSpec((L2p, Ap), const),
            pl.BlockSpec((1, Ap), const),
        ],
        out_specs=pl.BlockSpec((Aout, tb), lambda i: (0, i)),
        compiler_params=pltpu.CompilerParams(dimension_semantics=("parallel",)),
        cost_estimate=pl.CostEstimate(
            flops=flops, transcendentals=0, bytes_accessed=bytes_accessed),
    )(xp, w1p, b1p, w2p, b2p, w3p, b3p)

    # (Aout, Bp) -> (B, A): tiny XLA slice+transpose over the real result only.
    return out_t[:A, :B].T


def init_params(key, state_size, action_size, layer_1_size=32, layer_2_size=64):
    """Deterministic init mimicking nn.Linear's U(-1/sqrt(fan_in), 1/sqrt(fan_in))."""
    ks = jax.random.split(key, 6)

    def linear(kw, kb, fan_in, fan_out):
        bound = 1.0 / jnp.sqrt(fan_in)
        w = jax.random.uniform(kw, (fan_in, fan_out), jnp.float32, -bound, bound)
        b = jax.random.uniform(kb, (1, fan_out), jnp.float32, -bound, bound)
        return w, b

    w1, b1 = linear(ks[0], ks[1], state_size, layer_1_size)
    w2, b2 = linear(ks[2], ks[3], layer_1_size, layer_2_size)
    w3, b3 = linear(ks[4], ks[5], layer_2_size, action_size)
    return {"w1": w1, "b1": b1, "w2": w2, "b2": b2, "w3": w3, "b3": b3}


def _ref_forward_bf16(x, p):
    """Pure-JAX reference using the same mixed precision as the kernel."""
    h1 = jnp.maximum(
        jnp.dot(x.astype(jnp.bfloat16), p["w1"].astype(jnp.bfloat16),
                preferred_element_type=jnp.float32) + p["b1"], 0.0)
    h2 = jnp.maximum(
        jnp.dot(h1.astype(jnp.bfloat16), p["w2"].astype(jnp.bfloat16),
                preferred_element_type=jnp.float32) + p["b2"], 0.0)
    return jnp.dot(h2.astype(jnp.bfloat16), p["w3"].astype(jnp.bfloat16),
                   preferred_element_type=jnp.float32) + p["b3"]


def _ref_forward_f32(x, p):
    h1 = jnp.maximum(x @ p["w1"] + p["b1"], 0.0)
    h2 = jnp.maximum(h1 @ p["w2"] + p["b2"], 0.0)
    return h2 @ p["w3"] + p["b3"]


if __name__ == "__main__":
    key = jax.random.PRNGKey(0)
    k_x, k_p = jax.random.split(key)

    batch, state_size, action_size = 8, 16, 4
    x = jax.random.normal(k_x, (batch, state_size), jnp.float32)
    params = init_params(k_p, state_size, action_size)

    fwd = jax.jit(functools.partial(qnetwork_forward, block_b=2048))
    out = fwd(x, params)
    jax.block_until_ready(out)

    assert out.shape == (batch, action_size)

    # Exact-math check vs. a pure-JAX reference using identical bf16-matmul / f32-accum math.
    ref_bf16 = _ref_forward_bf16(x, params)
    assert jnp.allclose(out, ref_bf16, atol=1e-4, rtol=1e-4), (
        jnp.max(jnp.abs(out - ref_bf16)))

    # Semantic sanity check vs. full-f32 math (bf16 rounding only).
    ref_f32 = _ref_forward_f32(x, params)
    assert jnp.allclose(out, ref_f32, atol=3e-2, rtol=3e-2), (
        jnp.max(jnp.abs(out - ref_f32)))

    print("KERNEL_OK")
</pallas_src>

<mosaic_0001>
module attributes {stable_mosaic.version = 11 : i64} {
  func.func @qnet_kernel(%arg0: i32, %arg1: memref<128x16xf32, #tpu.memory_space<vmem>>, %arg2: memref<16x128xbf16, #tpu.memory_space<vmem>>, %arg3: memref<1x128xf32, #tpu.memory_space<vmem>>, %arg4: memref<128x128xbf16, #tpu.memory_space<vmem>>, %arg5: memref<1x128xf32, #tpu.memory_space<vmem>>, %arg6: memref<128x128xbf16, #tpu.memory_space<vmem>>, %arg7: memref<1x128xf32, #tpu.memory_space<vmem>>, %arg8: memref<8x128xf32, #tpu.memory_space<vmem>>) attributes {dimension_semantics = [#tpu.dimension_semantics<parallel>], iteration_bounds = array<i64: 1>, scalar_prefetch = 0 : i64, scratch_operands = 0 : i64, tpu.core_type = #tpu.core_type<tc>, window_params = [{transform_indices = @transform_0, window_bounds = array<i64: 128, 16>}, {pipeline_mode = #tpu.pipeline_mode<synchronous>, transform_indices = @transform_1, window_bounds = array<i64: 16, 128>}, {pipeline_mode = #tpu.pipeline_mode<synchronous>, transform_indices = @transform_2, window_bounds = array<i64: 1, 128>}, {pipeline_mode = #tpu.pipeline_mode<synchronous>, transform_indices = @transform_3, window_bounds = array<i64: 128, 128>}, {pipeline_mode = #tpu.pipeline_mode<synchronous>, transform_indices = @transform_4, window_bounds = array<i64: 1, 128>}, {pipeline_mode = #tpu.pipeline_mode<synchronous>, transform_indices = @transform_5, window_bounds = array<i64: 128, 128>}, {pipeline_mode = #tpu.pipeline_mode<synchronous>, transform_indices = @transform_6, window_bounds = array<i64: 1, 128>}, {transform_indices = @transform_7, window_bounds = array<i64: 8, 128>}]} {
    %c0 = arith.constant 0 : index
    %c0_0 = arith.constant 0 : index
    %0 = vector.load %arg1[%c0, %c0_0] : memref<128x16xf32, #tpu.memory_space<vmem>>, vector<128x16xf32>
    %1 = arith.truncf %0 : vector<128x16xf32> to vector<128x16xbf16>
    %c0_1 = arith.constant 0 : index
    %c0_2 = arith.constant 0 : index
    %2 = vector.load %arg2[%c0_1, %c0_2] : memref<16x128xbf16, #tpu.memory_space<vmem>>, vector<16x128xbf16>
    %cst = arith.constant dense<0.000000e+00> : vector<128x128xf32>
    %3 = tpu.matmul %1, %2, %cst {dimension_numbers = #tpu.dot_dimension_numbers<[1], [0], [0], [1], [0, 0, 1, 1], [], []>} : vector<128x16xbf16>, vector<16x128xbf16>, vector<128x128xf32> -> vector<128x128xf32>
    %c0_3 = arith.constant 0 : index
    %c0_4 = arith.constant 0 : index
    %4 = vector.load %arg3[%c0_3, %c0_4] : memref<1x128xf32, #tpu.memory_space<vmem>>, vector<1x128xf32>
    %5 = vector.broadcast %4 : vector<1x128xf32> to vector<128x128xf32>
    %6 = arith.addf %3, %5 : vector<128x128xf32>
    %cst_5 = arith.constant 0.000000e+00 : f32
    %7 = vector.broadcast %cst_5 : f32 to vector<128x128xf32>
    %8 = arith.maximumf %6, %7 : vector<128x128xf32>
    %9 = arith.truncf %8 : vector<128x128xf32> to vector<128x128xbf16>
    %c0_6 = arith.constant 0 : index
    %c0_7 = arith.constant 0 : index
    %10 = vector.load %arg4[%c0_6, %c0_7] : memref<128x128xbf16, #tpu.memory_space<vmem>>, vector<128x128xbf16>
    %cst_8 = arith.constant dense<0.000000e+00> : vector<128x128xf32>
    %11 = tpu.matmul %9, %10, %cst_8 {dimension_numbers = #tpu.dot_dimension_numbers<[1], [0], [0], [1], [0, 0, 1, 1], [], []>} : vector<128x128xbf16>, vector<128x128xbf16>, vector<128x128xf32> -> vector<128x128xf32>
    %c0_9 = arith.constant 0 : index
    %c0_10 = arith.constant 0 : index
    %12 = vector.load %arg5[%c0_9, %c0_10] : memref<1x128xf32, #tpu.memory_space<vmem>>, vector<1x128xf32>
    %13 = vector.broadcast %12 : vector<1x128xf32> to vector<128x128xf32>
    %14 = arith.addf %11, %13 : vector<128x128xf32>
    %cst_11 = arith.constant 0.000000e+00 : f32
    %15 = vector.broadcast %cst_11 : f32 to vector<128x128xf32>
    %16 = arith.maximumf %14, %15 : vector<128x128xf32>
    %17 = arith.truncf %16 : vector<128x128xf32> to vector<128x128xbf16>
    %c0_12 = arith.constant 0 : index
    %c0_13 = arith.constant 0 : index
    %18 = vector.load %arg6[%c0_12, %c0_13] : memref<128x128xbf16, #tpu.memory_space<vmem>>, vector<128x128xbf16>
    %cst_14 = arith.constant dense<0.000000e+00> : vector<128x128xf32>
    %19 = tpu.matmul %17, %18, %cst_14 {dimension_numbers = #tpu.dot_dimension_numbers<[1], [0], [0], [1], [0, 0, 1, 1], [], []>} : vector<128x128xbf16>, vector<128x128xbf16>, vector<128x128xf32> -> vector<128x128xf32>
    %c0_15 = arith.constant 0 : index
    %c0_16 = arith.constant 0 : index
    %20 = vector.load %arg7[%c0_15, %c0_16] : memref<1x128xf32, #tpu.memory_space<vmem>>, vector<1x128xf32>
    %21 = vector.broadcast %20 : vector<1x128xf32> to vector<128x128xf32>
    %22 = arith.addf %19, %21 : vector<128x128xf32>
    %23 = tpu.transpose %22, [1, 0] : vector<128x128xf32> -> vector<128x128xf32>
    %24 = vector.extract_strided_slice %23 {offsets = [0, 0], sizes = [8, 128], strides = [1, 1]} : vector<128x128xf32> to vector<8x128xf32>
    %c0_17 = arith.constant 0 : index
    %c0_18 = arith.constant 0 : index
    %25 = vector.load %arg8[%c0_17, %c0_18] : memref<8x128xf32, #tpu.memory_space<vmem>>, vector<8x128xf32>
    tpu.vector_store %arg8[%c0_17, %c0_18], %24 {strides = array<i32>} : memref<8x128xf32, #tpu.memory_space<vmem>>, vector<8x128xf32>,
    return
  }
  func.func @transform_0(%arg0: i32) -> (i32, i32) {
    %c0_i32 = arith.constant 0 : i32
    %c0_i32_0 = arith.constant 0 : i32
    return %arg0, %c0_i32 : i32, i32
  }
  func.func @transform_1(%arg0: i32) -> (i32, i32) {
    %c0_i32 = arith.constant 0 : i32
    %c0_i32_0 = arith.constant 0 : i32
    %c0_i32_1 = arith.constant 0 : i32
    return %c0_i32, %c0_i32_0 : i32, i32
  }
  func.func @transform_2(%arg0: i32) -> (i32, i32) {
    %c0_i32 = arith.constant 0 : i32
    %c0_i32_0 = arith.constant 0 : i32
    %c0_i32_1 = arith.constant 0 : i32
    return %c0_i32, %c0_i32_0 : i32, i32
  }
  func.func @transform_3(%arg0: i32) -> (i32, i32) {
    %c0_i32 = arith.constant 0 : i32
    %c0_i32_0 = arith.constant 0 : i32
    %c0_i32_1 = arith.constant 0 : i32
    return %c0_i32, %c0_i32_0 : i32, i32
  }
  func.func @transform_4(%arg0: i32) -> (i32, i32) {
    %c0_i32 = arith.constant 0 : i32
    %c0_i32_0 = arith.constant 0 : i32
    %c0_i32_1 = arith.constant 0 : i32
    return %c0_i32, %c0_i32_0 : i32, i32
  }
  func.func @transform_5(%arg0: i32) -> (i32, i32) {
    %c0_i32 = arith.constant 0 : i32
    %c0_i32_0 = arith.constant 0 : i32
    %c0_i32_1 = arith.constant 0 : i32
    return %c0_i32, %c0_i32_0 : i32, i32
  }
  func.func @transform_6(%arg0: i32) -> (i32, i32) {
    %c0_i32 = arith.constant 0 : i32
    %c0_i32_0 = arith.constant 0 : i32
    %c0_i32_1 = arith.constant 0 : i32
    return %c0_i32, %c0_i32_0 : i32, i32
  }
  func.func @transform_7(%arg0: i32) -> (i32, i32) {
    %c0_i32 = arith.constant 0 : i32
    %c0_i32_0 = arith.constant 0 : i32
    return %c0_i32, %arg0 : i32, i32
  }
}

</mosaic_0001>

<llo_original>
// kernel: qnetwork_forward.1
$region0: #{qnetwork_forward.1}
  #allocation0 [shape = 'u32[]', space=smem, size = 0x4, offset = 0x4, fixed_abs, tag = 'smem constant byte address 0x4 - core index']
  #allocation1 [shape = 'u32[72,128]{1,0:T(1,128)}', space=vmem, size = 0x9000, scoped, tag = 'internal scratch']
  %s0 = inlined_call_operand.vmem [shape: f32[128,16], index: 0, kind: input, shape index: {}]
  %s1 = inlined_call_operand.vmem [shape: bf16[16,128], index: 1, kind: input, shape index: {}]
  %s2 = inlined_call_operand.vmem [shape: f32[1,128], index: 2, kind: input, shape index: {}]
  %s3 = inlined_call_operand.vmem [shape: bf16[128,128], index: 3, kind: input, shape index: {}]
  %s4 = inlined_call_operand.vmem [shape: f32[1,128], index: 4, kind: input, shape index: {}]
  %s5 = inlined_call_operand.vmem [shape: bf16[128,128], index: 5, kind: input, shape index: {}]
  %s6 = inlined_call_operand.vmem [shape: f32[1,128], index: 6, kind: input, shape index: {}]
  %s7 = inlined_call_operand.vmem [shape: f32[8,128], index: 7, kind: output, shape index: {}]
  %s8 = sld [smem:[#allocation0]]
  $region38: #{qnetwork_forward.1} parent=0
    _
  %s10 = ssub.s32 1, %s8
  %s11 = scalar_select 0, %s10, %s8
  // Predicated region
  $region2: #{qnetwork_forward.1} parent=0 // pred_check
    _
  $region3: #{qnetwork_forward.1} parent=0 // pred_check_branch
    %13 = sbr.rel (0) target = $region5
  $region4: #{qnetwork_forward.1} parent=0 // pred_region
    _
  $region5: #{qnetwork_forward.1} parent=0 // pred_fallthru
    _
  // Predicated region
  $region6: #{qnetwork_forward.1} parent=0 // pred_check
    _
  $region7: #{qnetwork_forward.1} parent=0 // pred_check_branch
    %15 = sbr.rel (0) target = $region9
  $region8: #{qnetwork_forward.1} parent=0 // pred_region
    _
  $region9: #{qnetwork_forward.1} parent=0 // pred_fallthru
    _
  // Predicated region
  $region10: #{qnetwork_forward.1} parent=0 // pred_check
    _
  $region11: #{qnetwork_forward.1} parent=0 // pred_check_branch
    %17 = sbr.rel (0) target = $region13
  $region12: #{qnetwork_forward.1} parent=0 // pred_region
    _
  $region13: #{qnetwork_forward.1} parent=0 // pred_fallthru
    _
  // Predicated region
  $region14: #{qnetwork_forward.1} parent=0 // pred_check
    _
  $region15: #{qnetwork_forward.1} parent=0 // pred_check_branch
    %19 = sbr.rel (0) target = $region17
  $region16: #{qnetwork_forward.1} parent=0 // pred_region
    _
  $region17: #{qnetwork_forward.1} parent=0 // pred_fallthru
    _
  // Predicated region
  $region18: #{qnetwork_forward.1} parent=0 // pred_check
    _
  $region19: #{qnetwork_forward.1} parent=0 // pred_check_branch
    %21 = sbr.rel (0) target = $region21
  $region20: #{qnetwork_forward.1} parent=0 // pred_region
    _
  $region21: #{qnetwork_forward.1} parent=0 // pred_fallthru
    _
  // Predicated region
  $region22: #{qnetwork_forward.1} parent=0 // pred_check
    _
  $region23: #{qnetwork_forward.1} parent=0 // pred_check_branch
    %23 = sbr.rel (0) target = $region25
  $region24: #{qnetwork_forward.1} parent=0 // pred_region
    _
  $region25: #{qnetwork_forward.1} parent=0 // pred_fallthru
    _
  // Predicated region
  $region26: #{qnetwork_forward.1} parent=0 // pred_check
    _
  $region27: #{qnetwork_forward.1} parent=0 // pred_check_branch
    %25 = sbr.rel (0) target = $region29
  $region28: #{qnetwork_forward.1} parent=0 // pred_region
    _
  $region29: #{qnetwork_forward.1} parent=0 // pred_fallthru
    _
  %v27 = vld [vmem:[%s0] sm:$0xff]
  %v28 = vld [vmem:[%s0 + $0x8] sm:$0xff]
  %v29 = vld [vmem:[%s0 + $0x10] sm:$0xff]
  %v30 = vld [vmem:[%s0 + $0x18] sm:$0xff]
  %v31 = vld [vmem:[%s0 + $0x20] sm:$0xff]
  %v32 = vld [vmem:[%s0 + $0x28] sm:$0xff]
  %v33 = vld [vmem:[%s0 + $0x30] sm:$0xff]
  %v34 = vld [vmem:[%s0 + $0x38] sm:$0xff]
  %v35 = vld [vmem:[%s0 + $0x40] sm:$0xff]
  %v36 = vld [vmem:[%s0 + $0x48] sm:$0xff]
  %v37 = vld [vmem:[%s0 + $0x50] sm:$0xff]
  %v38 = vld [vmem:[%s0 + $0x58] sm:$0xff]
  %v39 = vld [vmem:[%s0 + $0x60] sm:$0xff]
  %v40 = vld [vmem:[%s0 + $0x68] sm:$0xff]
  %v41 = vld [vmem:[%s0 + $0x70] sm:$0xff]
  %v42 = vld [vmem:[%s0 + $0x78] sm:$0xff]
  %v43 = vpack.c.bf16 %v28, %v27
  %v44 = vpack.c.bf16 %v30, %v29
  %v45 = vpack.c.bf16 %v32, %v31
  %v46 = vpack.c.bf16 %v34, %v33
  %v47 = vpack.c.bf16 %v36, %v35
  %v48 = vpack.c.bf16 %v38, %v37
  %v49 = vpack.c.bf16 %v40, %v39
  %v50 = vpack.c.bf16 %v42, %v41
  %v51 = vld [vmem:[%s1] sm:$0xf]
  %v52 = vld [vmem:[%s1 + $0x4] sm:$0xf]
  %v53 = vld [vmem:[%s2] sm:$0x1]
  %v55 = vperm.slane %v53, 0
  %v59 = vunpack.c.l.b16 %v51
  %v60 = vunpack.c.l.b16 %v52
  %v61 = vpack.c.b16 %v60, %v59
  %vm63 = vcmask 130048
  %v65 = vsel %vm63, %v43, 0
  %v68 = vsel %vm63, %v44, 0
  %v71 = vsel %vm63, %v45, 0
  %v74 = vsel %vm63, %v46, 0
  %v77 = vsel %vm63, %v47, 0
  %v80 = vsel %vm63, %v48, 0
  %v83 = vsel %vm63, %v49, 0
  %v86 = vsel %vm63, %v50, 0
  %88 = vmatpush.bf16.msra.mxu0 0
  %89 = vmatpush.bf16.msra.mxu0 0
  %90 = vmatpush.bf16.msra.mxu0 0
  %91 = vmatpush.bf16.msra.mxu0 0
  %92 = vmatpush.bf16.msra.mxu0 0
  %93 = vmatpush.bf16.msra.mxu0 0
  %94 = vmatpush.bf16.msra.mxu0 0
  %95 = vmatpush.bf16.msra.mxu0 %v61
  %96 = vmatmul.bf16.gmra.mxu0 %v65
  %v97 = vpop.f32.mrf.mxu0
  %v98 = vadd.f32 %v55, %v97
  %v99 = vpop.f32.mrf.mxu0
  %v100 = vadd.f32 %v55, %v99
  %101 = vmatmul.bf16.gmra.mxu0 %v68
  %v102 = vpop.f32.mrf.mxu0
  %v103 = vadd.f32 %v55, %v102
  %v104 = vpop.f32.mrf.mxu0
  %v105 = vadd.f32 %v55, %v104
  %106 = vmatmul.bf16.gmra.mxu0 %v71
  %v107 = vpop.f32.mrf.mxu0
  %v108 = vadd.f32 %v55, %v107
  %v109 = vpop.f32.mrf.mxu0
  %v110 = vadd.f32 %v55, %v109
  %111 = vmatmul.bf16.gmra.mxu0 %v74
  %v112 = vpop.f32.mrf.mxu0
  %v113 = vadd.f32 %v55, %v112
  %v114 = vpop.f32.mrf.mxu0
  %v115 = vadd.f32 %v55, %v114
  %116 = vmatmul.bf16.gmra.mxu0 %v77
  %v117 = vpop.f32.mrf.mxu0
  %v118 = vadd.f32 %v55, %v117
  %v119 = vpop.f32.mrf.mxu0
  %v120 = vadd.f32 %v55, %v119
  %121 = vmatmul.bf16.gmra.mxu0 %v80
  %v122 = vpop.f32.mrf.mxu0
  %v123 = vadd.f32 %v55, %v122
  %v124 = vpop.f32.mrf.mxu0
  %v125 = vadd.f32 %v55, %v124
  %126 = vmatmul.bf16.gmra.mxu0 %v83
  %v127 = vpop.f32.mrf.mxu0
  %v128 = vadd.f32 %v55, %v127
  %v129 = vpop.f32.mrf.mxu0
  %v130 = vadd.f32 %v55, %v129
  %131 = vmatmul.bf16.gmra.mxu0 %v86
  %v132 = vpop.f32.mrf.mxu0
  %v133 = vadd.f32 %v55, %v132
  %v134 = vpop.f32.mrf.mxu0
  %v135 = vadd.f32 %v55, %v134
  %136 = vdwg.mxu0
  %v137 = vmax.f32 %v98, 0.0
  %v138 = vmax.f32 %v100, 0.0
  %v139 = vmax.f32 %v103, 0.0
  %v140 = vmax.f32 %v105, 0.0
  %v141 = vmax.f32 %v108, 0.0
  %v142 = vmax.f32 %v110, 0.0
  %v143 = vmax.f32 %v113, 0.0
  %v144 = vmax.f32 %v115, 0.0
  %v145 = vmax.f32 %v118, 0.0
  %v146 = vmax.f32 %v120, 0.0
  %v147 = vmax.f32 %v123, 0.0
  %v148 = vmax.f32 %v125, 0.0
  %v149 = vmax.f32 %v128, 0.0
  %v150 = vmax.f32 %v130, 0.0
  %v151 = vmax.f32 %v133, 0.0
  %v152 = vmax.f32 %v135, 0.0
  %v153 = vpack.c.bf16 %v138, %v137
  %v154 = vpack.c.bf16 %v140, %v139
  %v155 = vpack.c.bf16 %v142, %v141
  %v156 = vpack.c.bf16 %v144, %v143
  %v157 = vpack.c.bf16 %v146, %v145
  %v158 = vpack.c.bf16 %v148, %v147
  %v159 = vpack.c.bf16 %v150, %v149
  %v160 = vpack.c.bf16 %v152, %v151
  %v161 = vld [vmem:[%s3] sm:$0xf]
  %v162 = vld [vmem:[%s3 + $0x4] sm:$0xf]
  %v163 = vld [vmem:[%s3 + $0x8] sm:$0xf]
  %v164 = vld [vmem:[%s3 + $0xc] sm:$0xf]
  %v165 = vld [vmem:[%s3 + $0x10] sm:$0xf]
  %v166 = vld [vmem:[%s3 + $0x14] sm:$0xf]
  %v167 = vld [vmem:[%s3 + $0x18] sm:$0xf]
  %v168 = vld [vmem:[%s3 + $0x1c] sm:$0xf]
  %v169 = vld [vmem:[%s3 + $0x20] sm:$0xf]
  %v170 = vld [vmem:[%s3 + $0x24] sm:$0xf]
  %v171 = vld [vmem:[%s3 + $0x28] sm:$0xf]
  %v172 = vld [vmem:[%s3 + $0x2c] sm:$0xf]
  %v173 = vld [vmem:[%s3 + $0x30] sm:$0xf]
  %v174 = vld [vmem:[%s3 + $0x34] sm:$0xf]
  %v175 = vld [vmem:[%s3 + $0x38] sm:$0xf]
  %v176 = vld [vmem:[%s3 + $0x3c] sm:$0xf]
  %v177 = vld [vmem:[%s4] sm:$0x1]
  %v179 = vperm.slane %v177, 0
  %v197 = vunpack.c.l.b16 %v161
  %v198 = vunpack.c.l.b16 %v162
  %v199 = vunpack.c.l.b16 %v163
  %v200 = vunpack.c.l.b16 %v164
  %v201 = vunpack.c.l.b16 %v165
  %v202 = vunpack.c.l.b16 %v166
  %v203 = vunpack.c.l.b16 %v167
  %v204 = vunpack.c.l.b16 %v168
  %v205 = vunpack.c.l.b16 %v169
  %v206 = vunpack.c.l.b16 %v170
  %v207 = vunpack.c.l.b16 %v171
  %v208 = vunpack.c.l.b16 %v172
  %v209 = vunpack.c.l.b16 %v173
  %v210 = vunpack.c.l.b16 %v174
  %v211 = vunpack.c.l.b16 %v175
  %v212 = vunpack.c.l.b16 %v176
  %v213 = vpack.c.b16 %v198, %v197
  %v214 = vpack.c.b16 %v200, %v199
  %v215 = vpack.c.b16 %v202, %v201
  %v216 = vpack.c.b16 %v204, %v203
  %v217 = vpack.c.b16 %v206, %v205
  %v218 = vpack.c.b16 %v208, %v207
  %v219 = vpack.c.b16 %v210, %v209
  %v220 = vpack.c.b16 %v212, %v211
  %229 = vmatpush.bf16.msra.mxu0 %v220
  %230 = vmatpush.bf16.msra.mxu0 %v219
  %231 = vmatpush.bf16.msra.mxu0 %v218
  %232 = vmatpush.bf16.msra.mxu0 %v217
  %233 = vmatpush.bf16.msra.mxu0 %v216
  %234 = vmatpush.bf16.msra.mxu0 %v215
  %235 = vmatpush.bf16.msra.mxu0 %v214
  %236 = vmatpush.bf16.msra.mxu0 %v213
  %237 = vmatmul.bf16.gmra.mxu0 %v153
  %v238 = vpop.f32.mrf.mxu0
  %v239 = vadd.f32 %v179, %v238
  %v240 = vpop.f32.mrf.mxu0
  %v241 = vadd.f32 %v179, %v240
  %242 = vmatmul.bf16.gmra.mxu0 %v154
  %v243 = vpop.f32.mrf.mxu0
  %v244 = vadd.f32 %v179, %v243
  %v245 = vpop.f32.mrf.mxu0
  %v246 = vadd.f32 %v179, %v245
  %247 = vmatmul.bf16.gmra.mxu0 %v155
  %v248 = vpop.f32.mrf.mxu0
  %v249 = vadd.f32 %v179, %v248
  %v250 = vpop.f32.mrf.mxu0
  %v251 = vadd.f32 %v179, %v250
  %252 = vmatmul.bf16.gmra.mxu0 %v156
  %v253 = vpop.f32.mrf.mxu0
  %v254 = vadd.f32 %v179, %v253
  %v255 = vpop.f32.mrf.mxu0
  %v256 = vadd.f32 %v179, %v255
  %257 = vmatmul.bf16.gmra.mxu0 %v157
  %v258 = vpop.f32.mrf.mxu0
  %v259 = vadd.f32 %v179, %v258
  %v260 = vpop.f32.mrf.mxu0
  %v261 = vadd.f32 %v179, %v260
  %262 = vmatmul.bf16.gmra.mxu0 %v158
  %v263 = vpop.f32.mrf.mxu0
  %v264 = vadd.f32 %v179, %v263
  %v265 = vpop.f32.mrf.mxu0
  %v266 = vadd.f32 %v179, %v265
  %267 = vmatmul.bf16.gmra.mxu0 %v159
  %v268 = vpop.f32.mrf.mxu0
  %v269 = vadd.f32 %v179, %v268
  %v270 = vpop.f32.mrf.mxu0
  %v271 = vadd.f32 %v179, %v270
  %272 = vmatmul.bf16.gmra.mxu0 %v160
  %v273 = vpop.f32.mrf.mxu0
  %v274 = vadd.f32 %v179, %v273
  %v275 = vpop.f32.mrf.mxu0
  %v276 = vadd.f32 %v179, %v275
  %277 = vdwg.mxu0
  %v278 = vmax.f32 %v239, 0.0
  %v279 = vmax.f32 %v241, 0.0
  %v280 = vmax.f32 %v244, 0.0
  %v281 = vmax.f32 %v246, 0.0
  %v282 = vmax.f32 %v249, 0.0
  %v283 = vmax.f32 %v251, 0.0
  %v284 = vmax.f32 %v254, 0.0
  %v285 = vmax.f32 %v256, 0.0
  %v286 = vmax.f32 %v259, 0.0
  %v287 = vmax.f32 %v261, 0.0
  %v288 = vmax.f32 %v264, 0.0
  %v289 = vmax.f32 %v266, 0.0
  %v290 = vmax.f32 %v269, 0.0
  %v291 = vmax.f32 %v271, 0.0
  %v292 = vmax.f32 %v274, 0.0
  %v293 = vmax.f32 %v276, 0.0
  %v294 = vpack.c.bf16 %v279, %v278
  %v295 = vpack.c.bf16 %v281, %v280
  %v296 = vpack.c.bf16 %v283, %v282
  %v297 = vpack.c.bf16 %v285, %v284
  %v298 = vpack.c.bf16 %v287, %v286
  %v299 = vpack.c.bf16 %v289, %v288
  %v300 = vpack.c.bf16 %v291, %v290
  %v301 = vpack.c.bf16 %v293, %v292
  %v302 = vld [vmem:[%s5] sm:$0xf]
  %v303 = vld [vmem:[%s5 + $0x4] sm:$0xf]
  %v304 = vld [vmem:[%s5 + $0x8] sm:$0xf]
  %v305 = vld [vmem:[%s5 + $0xc] sm:$0xf]
  %v306 = vld [vmem:[%s5 + $0x10] sm:$0xf]
  %v307 = vld [vmem:[%s5 + $0x14] sm:$0xf]
  %v308 = vld [vmem:[%s5 + $0x18] sm:$0xf]
  %v309 = vld [vmem:[%s5 + $0x1c] sm:$0xf]
  %v310 = vld [vmem:[%s5 + $0x20] sm:$0xf]
  %v311 = vld [vmem:[%s5 + $0x24] sm:$0xf]
  %v312 = vld [vmem:[%s5 + $0x28] sm:$0xf]
  %v313 = vld [vmem:[%s5 + $0x2c] sm:$0xf]
  %v314 = vld [vmem:[%s5 + $0x30] sm:$0xf]
  %v315 = vld [vmem:[%s5 + $0x34] sm:$0xf]
  %v316 = vld [vmem:[%s5 + $0x38] sm:$0xf]
  %v317 = vld [vmem:[%s5 + $0x3c] sm:$0xf]
  %v318 = vld [vmem:[%s6] sm:$0x1]
  %v320 = vperm.slane %v318, 0
  %v338 = vunpack.c.l.b16 %v302
  %v339 = vunpack.c.l.b16 %v303
  %v340 = vunpack.c.l.b16 %v304
  %v341 = vunpack.c.l.b16 %v305
  %v342 = vunpack.c.l.b16 %v306
  %v343 = vunpack.c.l.b16 %v307
  %v344 = vunpack.c.l.b16 %v308
  %v345 = vunpack.c.l.b16 %v309
  %v346 = vunpack.c.l.b16 %v310
  %v347 = vunpack.c.l.b16 %v311
  %v348 = vunpack.c.l.b16 %v312
  %v349 = vunpack.c.l.b16 %v313
  %v350 = vunpack.c.l.b16 %v314
  %v351 = vunpack.c.l.b16 %v315
  %v352 = vunpack.c.l.b16 %v316
  %v353 = vunpack.c.l.b16 %v317
  %v354 = vpack.c.b16 %v339, %v338
  %v355 = vpack.c.b16 %v341, %v340
  %v356 = vpack.c.b16 %v343, %v342
  %v357 = vpack.c.b16 %v345, %v344
  %v358 = vpack.c.b16 %v347, %v346
  %v359 = vpack.c.b16 %v349, %v348
  %v360 = vpack.c.b16 %v351, %v350
  %v361 = vpack.c.b16 %v353, %v352
  %370 = vmatpush.bf16.msra.mxu0 %v361
  %371 = vmatpush.bf16.msra.mxu0 %v360
  %372 = vmatpush.bf16.msra.mxu0 %v359
  %373 = vmatpush.bf16.msra.mxu0 %v358
  %374 = vmatpush.bf16.msra.mxu0 %v357
  %375 = vmatpush.bf16.msra.mxu0 %v356
  %376 = vmatpush.bf16.msra.mxu0 %v355
  %377 = vmatpush.bf16.msra.mxu0 %v354
  %378 = vmatmul.bf16.gmra.mxu0 %v294
  %v379 = vpop.f32.mrf.mxu0
  %v380 = vadd.f32 %v320, %v379
  %v381 = vpop.f32.mrf.mxu0
  %v382 = vadd.f32 %v320, %v381
  %383 = vmatmul.bf16.gmra.mxu0 %v295
  %v384 = vpop.f32.mrf.mxu0
  %v385 = vadd.f32 %v320, %v384
  %v386 = vpop.f32.mrf.mxu0
  %v387 = vadd.f32 %v320, %v386
  %388 = vmatmul.bf16.gmra.mxu0 %v296
  %v389 = vpop.f32.mrf.mxu0
  %v390 = vadd.f32 %v320, %v389
  %v391 = vpop.f32.mrf.mxu0
  %v392 = vadd.f32 %v320, %v391
  %393 = vmatmul.bf16.gmra.mxu0 %v297
  %v394 = vpop.f32.mrf.mxu0
  %v395 = vadd.f32 %v320, %v394
  %v396 = vpop.f32.mrf.mxu0
  %v397 = vadd.f32 %v320, %v396
  %398 = vmatmul.bf16.gmra.mxu0 %v298
  %v399 = vpop.f32.mrf.mxu0
  %v400 = vadd.f32 %v320, %v399
  %v401 = vpop.f32.mrf.mxu0
  %v402 = vadd.f32 %v320, %v401
  %403 = vmatmul.bf16.gmra.mxu0 %v299
  %v404 = vpop.f32.mrf.mxu0
  %v405 = vadd.f32 %v320, %v404
  %v406 = vpop.f32.mrf.mxu0
  %v407 = vadd.f32 %v320, %v406
  %408 = vmatmul.bf16.gmra.mxu0 %v300
  %v409 = vpop.f32.mrf.mxu0
  %v410 = vadd.f32 %v320, %v409
  %v411 = vpop.f32.mrf.mxu0
  %v412 = vadd.f32 %v320, %v411
  %413 = vmatmul.bf16.gmra.mxu0 %v301
  %v414 = vpop.f32.mrf.mxu0
  %v415 = vadd.f32 %v320, %v414
  %v416 = vpop.f32.mrf.mxu0
  %v417 = vadd.f32 %v320, %v416
  %418 = vdwg.mxu0
  %419 = vxpose.xlu0.b32.start [1/16] %v380, 128
  %420 = vxpose.xlu0.b32.cont [2/16] %v382, 128
  %421 = vxpose.xlu0.b32.cont [3/16] %v385, 128
  %422 = vxpose.xlu0.b32.cont [4/16] %v387, 128
  %423 = vxpose.xlu0.b32.cont [5/16] %v390, 128
  %424 = vxpose.xlu0.b32.cont [6/16] %v392, 128
  %425 = vxpose.xlu0.b32.cont [7/16] %v395, 128
  %426 = vxpose.xlu0.b32.cont [8/16] %v397, 128
  %427 = vxpose.xlu0.b32.cont [9/16] %v400, 128
  %428 = vxpose.xlu0.b32.cont [10/16] %v402, 128
  %429 = vxpose.xlu0.b32.cont [11/16] %v405, 128
  %430 = vxpose.xlu0.b32.cont [12/16] %v407, 128
  %431 = vxpose.xlu0.b32.cont [13/16] %v410, 128
  %432 = vxpose.xlu0.b32.cont [14/16] %v412, 128
  %433 = vxpose.xlu0.b32.cont [15/16] %v415, 128
  %434 = vxpose.xlu0.b32.end [16/16] %v417, 128
  %v435 = vpop.trf.xlu0
  %v436 = vpop.trf.xlu0
  %v437 = vpop.trf.xlu0
  %v438 = vpop.trf.xlu0
  %v439 = vpop.trf.xlu0
  %v440 = vpop.trf.xlu0
  %v441 = vpop.trf.xlu0
  %v442 = vpop.trf.xlu0
  %v443 = vpop.trf.xlu0
  %v444 = vpop.trf.xlu0
  %v445 = vpop.trf.xlu0
  %v446 = vpop.trf.xlu0
  %v447 = vpop.trf.xlu0
  %v448 = vpop.trf.xlu0
  %v449 = vpop.trf.xlu0
  %v450 = vpop.trf.xlu0
  %451 = vst [vmem:[%s7] sm:$0xff] %v435
  // Predicated region
  $region30: #{qnetwork_forward.1} parent=0 // pred_check
    _
  $region31: #{qnetwork_forward.1} parent=0 // pred_check_branch
    %453 = sbr.rel (0) target = $region33
  $region32: #{qnetwork_forward.1} parent=0 // pred_region
    _
  $region33: #{qnetwork_forward.1} parent=0 // pred_fallthru
    _
  // Predicated region
  $region34: #{qnetwork_forward.1} parent=0 // pred_check
    _
  $region35: #{qnetwork_forward.1} parent=0 // pred_check_branch
    %455 = sbr.rel (0) target = $region37
  $region36: #{qnetwork_forward.1} parent=0 // pred_region
    _
  $region37: #{qnetwork_forward.1} parent=0 // pred_fallthru
    _

</llo_original>
